<compile_context>
chip_gen: v7x
topology: tpu7x:2x2x1
jax: 0.10.0
libtpu: 0.0.40
codegen_flags: <defaults>
</compile_context>

<pallas_src>
import functools

import jax
import jax.numpy as jnp
from jax.experimental import pallas as pl
from jax.experimental.pallas import tpu as pltpu


def _round_up(n, m):
    return ((n + m - 1) // m) * m


def estimate_rho_kernel(x_ref,
                        w1_ref, b1_ref,
                        w2_ref, b2_ref,
                        w3_ref, b3_ref,
                        w4_ref, b4_ref,
                        o_ref):
    # x / weights are bf16; all matmuls accumulate in f32 on the MXU.
    x = x_ref[...]

    h = jnp.dot(x, w1_ref[...], preferred_element_type=jnp.float32) + b1_ref[...]
    h = jnp.maximum(h, 0.0).astype(jnp.bfloat16)

    h = jnp.dot(h, w2_ref[...], preferred_element_type=jnp.float32) + b2_ref[...]
    h = jnp.maximum(h, 0.0).astype(jnp.bfloat16)

    h = jnp.dot(h, w3_ref[...], preferred_element_type=jnp.float32) + b3_ref[...]
    h = jnp.maximum(h, 0.0).astype(jnp.bfloat16)

    y = jnp.dot(h, w4_ref[...], preferred_element_type=jnp.float32) + b4_ref[...]

    # Numerically-stable softplus: max(y,0) + log1p(exp(-|y|)).
    o_ref[...] = jnp.maximum(y, 0.0) + jnp.log1p(jnp.exp(-jnp.abs(y)))


@functools.partial(jax.jit, static_argnames=("block_batch",))
def estimate_rho_forward(x, params, *, block_batch=1024):
    """x: [B, input_dim] float32. params: dict of f32 weights/biases."""
    B, in_dim = x.shape
    h3_dim = params["w3"].shape[1]                 # 32 in the original module
    out_dim = params["w4"].shape[1]
    h3_pad = _round_up(max(h3_dim, 128), 128)      # lane-dense hidden width
    out_pad = _round_up(max(out_dim, 128), 128)    # lane-dense output width

    # Batch tile: multiple of 8, capped at block_batch, and (when possible)
    # at B/2 so the grid has >= 2 steps for megacore sharding.
    bb = min(block_batch, _round_up(B, 8))
    if B >= 16:
        bb = min(bb, _round_up(pl.cdiv(B, 2), 8))
    bb = max(8, bb)
    grid_b = pl.cdiv(B, bb)
    B_pad = grid_b * bb

    # Stream activations as bf16 (halves the x DMA); pad ragged batch.
    x_p = x.astype(jnp.bfloat16)
    if B_pad != B:
        x_p = jnp.pad(x_p, ((0, B_pad - B), (0, 0)))

    # Weights once-cast to bf16; biases stay f32 (added after f32 accumulation).
    # Pad the 32-wide hidden layer and the output layer to 128 lanes with zeros.
    w1 = params["w1"].astype(jnp.bfloat16)
    w2 = params["w2"].astype(jnp.bfloat16)
    w3 = jnp.pad(params["w3"].astype(jnp.bfloat16),
                 ((0, 0), (0, h3_pad - h3_dim)))
    w4 = jnp.pad(params["w4"].astype(jnp.bfloat16),
                 ((0, h3_pad - h3_dim), (0, out_pad - out_dim)))
    b1 = params["b1"].astype(jnp.float32)
    b2 = params["b2"].astype(jnp.float32)
    b3 = jnp.pad(params["b3"].astype(jnp.float32),
                 ((0, 0), (0, h3_pad - h3_dim)))
    b4 = jnp.pad(params["b4"].astype(jnp.float32),
                 ((0, 0), (0, out_pad - out_dim)))

    def w_spec(arr):
        return pl.BlockSpec(arr.shape, lambda i: (0, 0))

    in_specs = [
        pl.BlockSpec((bb, in_dim), lambda i: (i, 0)),
        w_spec(w1), w_spec(b1),
        w_spec(w2), w_spec(b2),
        w_spec(w3), w_spec(b3),
        w_spec(w4), w_spec(b4),
    ]
    out_spec = pl.BlockSpec((bb, out_pad), lambda i: (i, 0))

    # VMEM budget for one tile (double-buffered ins/outs + intermediates + weights),
    # with 2x headroom, floored at 32 MiB and capped below v7x physical VMEM.
    weight_bytes = sum(a.size * a.dtype.itemsize
                       for a in (w1, w2, w3, w4, b1, b2, b3, b4))
    h1_dim = params["w1"].shape[1]
    h2_dim = params["w2"].shape[1]
    vmem_est = (
        2 * bb * in_dim * 2                        # x, double-buffered, bf16
        + 2 * bb * out_pad * 4                     # out, double-buffered, f32
        + bb * (h1_dim + h2_dim + h3_pad) * 6      # intermediates (f32 acc + bf16 copy)
        + 2 * weight_bytes
    )
    vmem_limit = int(min(100 * 2**20, max(32 * 2**20, 2 * vmem_est)))

    out = pl.pallas_call(
        estimate_rho_kernel,
        out_shape=jax.ShapeDtypeStruct((B_pad, out_pad), jnp.float32),
        grid_spec=pltpu.PrefetchScalarGridSpec(
            num_scalar_prefetch=0,
            grid=(grid_b,),
            in_specs=in_specs,
            out_specs=out_spec,
        ),
        compiler_params=pltpu.CompilerParams(
            dimension_semantics=("parallel",),
            vmem_limit_bytes=vmem_limit,
        ),
    )(x_p, w1, b1, w2, b2, w3, b3, w4, b4)

    # Drop batch padding and the zero-padded (softplus(0)=log 2) output lanes.
    return out[:B, :out_dim]


def init_params(key, input_dim, output_dim):
    """Deterministic init mimicking nn.Linear default (uniform +/- 1/sqrt(fan_in))."""
    dims = [(input_dim, 512), (512, 128), (128, 32), (32, output_dim)]
    params = {}
    keys = jax.random.split(key, 2 * len(dims))
    for idx, (fan_in, fan_out) in enumerate(dims):
        bound = 1.0 / jnp.sqrt(float(fan_in))
        w = jax.random.uniform(keys[2 * idx], (fan_in, fan_out),
                               minval=-bound, maxval=bound, dtype=jnp.float32)
        b = jax.random.uniform(keys[2 * idx + 1], (1, fan_out),
                               minval=-bound, maxval=bound, dtype=jnp.float32)
        params[f"w{idx + 1}"] = w
        params[f"b{idx + 1}"] = b
    return params


def reference_forward(x, params):
    """Pure-JAX f32 reference (matches the PyTorch module semantics)."""
    h = x
    for i in range(1, 4):
        h = jnp.maximum(h @ params[f"w{i}"] + params[f"b{i}"], 0.0)
    y = h @ params["w4"] + params["b4"]
    return jnp.maximum(y, 0.0) + jnp.log1p(jnp.exp(-jnp.abs(y)))


if __name__ == "__main__":
    key = jax.random.PRNGKey(0)
    kx, kp = jax.random.split(key)

    batch, input_dim, output_dim = 8, 32, 4
    x = jax.random.normal(kx, (batch, input_dim), dtype=jnp.float32)
    params = init_params(kp, input_dim, output_dim)

    out = estimate_rho_forward(x, params)
    out = jax.block_until_ready(out)

    ref = reference_forward(x, params)
    assert out.shape == (batch, output_dim), out.shape
    # bf16 matmul operands (f32 accumulation) vs. f32 reference -> looser tolerance.
    assert jnp.allclose(out, ref, atol=3e-2, rtol=3e-2), "mismatch vs reference"

    print("KERNEL_OK")
</pallas_src>

<mosaic_0001>
module attributes {stable_mosaic.version = 11 : i64} {
  func.func @estimate_rho_kernel(%arg0: i32, %arg1: memref<8x32xbf16, #tpu.memory_space<vmem>>, %arg2: memref<32x512xbf16, #tpu.memory_space<vmem>>, %arg3: memref<1x512xf32, #tpu.memory_space<vmem>>, %arg4: memref<512x128xbf16, #tpu.memory_space<vmem>>, %arg5: memref<1x128xf32, #tpu.memory_space<vmem>>, %arg6: memref<128x128xbf16, #tpu.memory_space<vmem>>, %arg7: memref<1x128xf32, #tpu.memory_space<vmem>>, %arg8: memref<128x128xbf16, #tpu.memory_space<vmem>>, %arg9: memref<1x128xf32, #tpu.memory_space<vmem>>, %arg10: memref<8x128xf32, #tpu.memory_space<vmem>>) attributes {dimension_semantics = [#tpu.dimension_semantics<parallel>], iteration_bounds = array<i64: 1>, scalar_prefetch = 0 : i64, scratch_operands = 0 : i64, tpu.core_type = #tpu.core_type<tc>, window_params = [{transform_indices = @transform_0, window_bounds = array<i64: 8, 32>}, {pipeline_mode = #tpu.pipeline_mode<synchronous>, transform_indices = @transform_1, window_bounds = array<i64: 32, 512>}, {pipeline_mode = #tpu.pipeline_mode<synchronous>, transform_indices = @transform_2, window_bounds = array<i64: 1, 512>}, {pipeline_mode = #tpu.pipeline_mode<synchronous>, transform_indices = @transform_3, window_bounds = array<i64: 512, 128>}, {pipeline_mode = #tpu.pipeline_mode<synchronous>, transform_indices = @transform_4, window_bounds = array<i64: 1, 128>}, {pipeline_mode = #tpu.pipeline_mode<synchronous>, transform_indices = @transform_5, window_bounds = array<i64: 128, 128>}, {pipeline_mode = #tpu.pipeline_mode<synchronous>, transform_indices = @transform_6, window_bounds = array<i64: 1, 128>}, {pipeline_mode = #tpu.pipeline_mode<synchronous>, transform_indices = @transform_7, window_bounds = array<i64: 128, 128>}, {pipeline_mode = #tpu.pipeline_mode<synchronous>, transform_indices = @transform_8, window_bounds = array<i64: 1, 128>}, {transform_indices = @transform_9, window_bounds = array<i64: 8, 128>}]} {
    %c0 = arith.constant 0 : index
    %c0_0 = arith.constant 0 : index
    %0 = vector.load %arg1[%c0, %c0_0] : memref<8x32xbf16, #tpu.memory_space<vmem>>, vector<8x32xbf16>
    %c0_1 = arith.constant 0 : index
    %c0_2 = arith.constant 0 : index
    %1 = vector.load %arg2[%c0_1, %c0_2] : memref<32x512xbf16, #tpu.memory_space<vmem>>, vector<32x512xbf16>
    %cst = arith.constant dense<0.000000e+00> : vector<8x512xf32>
    %2 = tpu.matmul %0, %1, %cst {dimension_numbers = #tpu.dot_dimension_numbers<[1], [0], [0], [1], [0, 0, 1, 1], [], []>} : vector<8x32xbf16>, vector<32x512xbf16>, vector<8x512xf32> -> vector<8x512xf32>
    %c0_3 = arith.constant 0 : index
    %c0_4 = arith.constant 0 : index
    %3 = vector.load %arg3[%c0_3, %c0_4] : memref<1x512xf32, #tpu.memory_space<vmem>>, vector<1x512xf32>
    %4 = vector.broadcast %3 : vector<1x512xf32> to vector<8x512xf32>
    %5 = arith.addf %2, %4 : vector<8x512xf32>
    %cst_5 = arith.constant 0.000000e+00 : f32
    %6 = vector.broadcast %cst_5 : f32 to vector<8x512xf32>
    %7 = arith.maximumf %5, %6 : vector<8x512xf32>
    %8 = arith.truncf %7 : vector<8x512xf32> to vector<8x512xbf16>
    %c0_6 = arith.constant 0 : index
    %c0_7 = arith.constant 0 : index
    %9 = vector.load %arg4[%c0_6, %c0_7] : memref<512x128xbf16, #tpu.memory_space<vmem>>, vector<512x128xbf16>
    %cst_8 = arith.constant dense<0.000000e+00> : vector<8x128xf32>
    %10 = tpu.matmul %8, %9, %cst_8 {dimension_numbers = #tpu.dot_dimension_numbers<[1], [0], [0], [1], [0, 0, 1, 1], [], []>} : vector<8x512xbf16>, vector<512x128xbf16>, vector<8x128xf32> -> vector<8x128xf32>
    %c0_9 = arith.constant 0 : index
    %c0_10 = arith.constant 0 : index
    %11 = vector.load %arg5[%c0_9, %c0_10] : memref<1x128xf32, #tpu.memory_space<vmem>>, vector<1x128xf32>
    %12 = vector.broadcast %11 : vector<1x128xf32> to vector<8x128xf32>
    %13 = arith.addf %10, %12 : vector<8x128xf32>
    %cst_11 = arith.constant 0.000000e+00 : f32
    %14 = vector.broadcast %cst_11 : f32 to vector<8x128xf32>
    %15 = arith.maximumf %13, %14 : vector<8x128xf32>
    %16 = arith.truncf %15 : vector<8x128xf32> to vector<8x128xbf16>
    %c0_12 = arith.constant 0 : index
    %c0_13 = arith.constant 0 : index
    %17 = vector.load %arg6[%c0_12, %c0_13] : memref<128x128xbf16, #tpu.memory_space<vmem>>, vector<128x128xbf16>
    %cst_14 = arith.constant dense<0.000000e+00> : vector<8x128xf32>
    %18 = tpu.matmul %16, %17, %cst_14 {dimension_numbers = #tpu.dot_dimension_numbers<[1], [0], [0], [1], [0, 0, 1, 1], [], []>} : vector<8x128xbf16>, vector<128x128xbf16>, vector<8x128xf32> -> vector<8x128xf32>
    %c0_15 = arith.constant 0 : index
    %c0_16 = arith.constant 0 : index
    %19 = vector.load %arg7[%c0_15, %c0_16] : memref<1x128xf32, #tpu.memory_space<vmem>>, vector<1x128xf32>
    %20 = vector.broadcast %19 : vector<1x128xf32> to vector<8x128xf32>
    %21 = arith.addf %18, %20 : vector<8x128xf32>
    %cst_17 = arith.constant 0.000000e+00 : f32
    %22 = vector.broadcast %cst_17 : f32 to vector<8x128xf32>
    %23 = arith.maximumf %21, %22 : vector<8x128xf32>
    %24 = arith.truncf %23 : vector<8x128xf32> to vector<8x128xbf16>
    %c0_18 = arith.constant 0 : index
    %c0_19 = arith.constant 0 : index
    %25 = vector.load %arg8[%c0_18, %c0_19] : memref<128x128xbf16, #tpu.memory_space<vmem>>, vector<128x128xbf16>
    %cst_20 = arith.constant dense<0.000000e+00> : vector<8x128xf32>
    %26 = tpu.matmul %24, %25, %cst_20 {dimension_numbers = #tpu.dot_dimension_numbers<[1], [0], [0], [1], [0, 0, 1, 1], [], []>} : vector<8x128xbf16>, vector<128x128xbf16>, vector<8x128xf32> -> vector<8x128xf32>
    %c0_21 = arith.constant 0 : index
    %c0_22 = arith.constant 0 : index
    %27 = vector.load %arg9[%c0_21, %c0_22] : memref<1x128xf32, #tpu.memory_space<vmem>>, vector<1x128xf32>
    %28 = vector.broadcast %27 : vector<1x128xf32> to vector<8x128xf32>
    %29 = arith.addf %26, %28 : vector<8x128xf32>
    %cst_23 = arith.constant 0.000000e+00 : f32
    %30 = vector.broadcast %cst_23 : f32 to vector<8x128xf32>
    %31 = arith.maximumf %29, %30 : vector<8x128xf32>
    %32 = math.absf %29 : vector<8x128xf32>
    %cst_24 = arith.constant 0.000000e+00 : f32
    %33 = vector.broadcast %cst_24 : f32 to vector<8x128xf32>
    %34 = arith.subf %33, %32 : vector<8x128xf32>
    %35 = math.exp %34 : vector<8x128xf32>
    %36 = math.log1p %35 : vector<8x128xf32>
    %37 = arith.addf %31, %36 : vector<8x128xf32>
    %c0_25 = arith.constant 0 : index
    %c0_26 = arith.constant 0 : index
    %38 = vector.load %arg10[%c0_25, %c0_26] : memref<8x128xf32, #tpu.memory_space<vmem>>, vector<8x128xf32>
    tpu.vector_store %arg10[%c0_25, %c0_26], %37 {strides = array<i32>} : memref<8x128xf32, #tpu.memory_space<vmem>>, vector<8x128xf32>,
    return
  }
  func.func @transform_0(%arg0: i32) -> (i32, i32) {
    %c0_i32 = arith.constant 0 : i32
    %c0_i32_0 = arith.constant 0 : i32
    return %arg0, %c0_i32 : i32, i32
  }
  func.func @transform_1(%arg0: i32) -> (i32, i32) {
    %c0_i32 = arith.constant 0 : i32
    %c0_i32_0 = arith.constant 0 : i32
    %c0_i32_1 = arith.constant 0 : i32
    return %c0_i32, %c0_i32_0 : i32, i32
  }
  func.func @transform_2(%arg0: i32) -> (i32, i32) {
    %c0_i32 = arith.constant 0 : i32
    %c0_i32_0 = arith.constant 0 : i32
    %c0_i32_1 = arith.constant 0 : i32
    return %c0_i32, %c0_i32_0 : i32, i32
  }
  func.func @transform_3(%arg0: i32) -> (i32, i32) {
    %c0_i32 = arith.constant 0 : i32
    %c0_i32_0 = arith.constant 0 : i32
    %c0_i32_1 = arith.constant 0 : i32
    return %c0_i32, %c0_i32_0 : i32, i32
  }
  func.func @transform_4(%arg0: i32) -> (i32, i32) {
    %c0_i32 = arith.constant 0 : i32
    %c0_i32_0 = arith.constant 0 : i32
    %c0_i32_1 = arith.constant 0 : i32
    return %c0_i32, %c0_i32_0 : i32, i32
  }
  func.func @transform_5(%arg0: i32) -> (i32, i32) {
    %c0_i32 = arith.constant 0 : i32
    %c0_i32_0 = arith.constant 0 : i32
    %c0_i32_1 = arith.constant 0 : i32
    return %c0_i32, %c0_i32_0 : i32, i32
  }
  func.func @transform_6(%arg0: i32) -> (i32, i32) {
    %c0_i32 = arith.constant 0 : i32
    %c0_i32_0 = arith.constant 0 : i32
    %c0_i32_1 = arith.constant 0 : i32
    return %c0_i32, %c0_i32_0 : i32, i32
  }
  func.func @transform_7(%arg0: i32) -> (i32, i32) {
    %c0_i32 = arith.constant 0 : i32
    %c0_i32_0 = arith.constant 0 : i32
    %c0_i32_1 = arith.constant 0 : i32
    return %c0_i32, %c0_i32_0 : i32, i32
  }
  func.func @transform_8(%arg0: i32) -> (i32, i32) {
    %c0_i32 = arith.constant 0 : i32
    %c0_i32_0 = arith.constant 0 : i32
    %c0_i32_1 = arith.constant 0 : i32
    return %c0_i32, %c0_i32_0 : i32, i32
  }
  func.func @transform_9(%arg0: i32) -> (i32, i32) {
    %c0_i32 = arith.constant 0 : i32
    %c0_i32_0 = arith.constant 0 : i32
    return %arg0, %c0_i32 : i32, i32
  }
}

</mosaic_0001>

<llo_original>
// kernel: estimate_rho_forward.1
$region0: #{estimate_rho_forward.1}
  #allocation0 [shape = 'u32[]', space=smem, size = 0x4, offset = 0x4, fixed_abs, tag = 'smem constant byte address 0x4 - core index']
  #allocation1 [shape = 'u32[144,128]{1,0:T(1,128)}', space=vmem, size = 0x12000, scoped, tag = 'internal scratch']
  %s0 = inlined_call_operand.vmem [shape: bf16[8,32], index: 0, kind: input, shape index: {}]
  %s1 = inlined_call_operand.vmem [shape: bf16[32,512], index: 1, kind: input, shape index: {}]
  %s2 = inlined_call_operand.vmem [shape: f32[1,512], index: 2, kind: input, shape index: {}]
  %s3 = inlined_call_operand.vmem [shape: bf16[512,128], index: 3, kind: input, shape index: {}]
  %s4 = inlined_call_operand.vmem [shape: f32[1,128], index: 4, kind: input, shape index: {}]
  %s5 = inlined_call_operand.vmem [shape: bf16[128,128], index: 5, kind: input, shape index: {}]
  %s6 = inlined_call_operand.vmem [shape: f32[1,128], index: 6, kind: input, shape index: {}]
  %s7 = inlined_call_operand.vmem [shape: bf16[128,128], index: 7, kind: input, shape index: {}]
  %s8 = inlined_call_operand.vmem [shape: f32[1,128], index: 8, kind: input, shape index: {}]
  %s9 = inlined_call_operand.vmem [shape: f32[8,128], index: 9, kind: output, shape index: {}]
  %s10 = sld [smem:[#allocation0]]
  $region46: #{estimate_rho_forward.1} parent=0
    _
  %s12 = ssub.s32 1, %s10
  %s13 = scalar_select 0, %s12, %s10
  // Predicated region
  $region2: #{estimate_rho_forward.1} parent=0 // pred_check
    _
  $region3: #{estimate_rho_forward.1} parent=0 // pred_check_branch
    %15 = sbr.rel (0) target = $region5
  $region4: #{estimate_rho_forward.1} parent=0 // pred_region
    _
  $region5: #{estimate_rho_forward.1} parent=0 // pred_fallthru
    _
  // Predicated region
  $region6: #{estimate_rho_forward.1} parent=0 // pred_check
    _
  $region7: #{estimate_rho_forward.1} parent=0 // pred_check_branch
    %17 = sbr.rel (0) target = $region9
  $region8: #{estimate_rho_forward.1} parent=0 // pred_region
    _
  $region9: #{estimate_rho_forward.1} parent=0 // pred_fallthru
    _
  // Predicated region
  $region10: #{estimate_rho_forward.1} parent=0 // pred_check
    _
  $region11: #{estimate_rho_forward.1} parent=0 // pred_check_branch
    %19 = sbr.rel (0) target = $region13
  $region12: #{estimate_rho_forward.1} parent=0 // pred_region
    _
  $region13: #{estimate_rho_forward.1} parent=0 // pred_fallthru
    _
  // Predicated region
  $region14: #{estimate_rho_forward.1} parent=0 // pred_check
    _
  $region15: #{estimate_rho_forward.1} parent=0 // pred_check_branch
    %21 = sbr.rel (0) target = $region17
  $region16: #{estimate_rho_forward.1} parent=0 // pred_region
    _
  $region17: #{estimate_rho_forward.1} parent=0 // pred_fallthru
    _
  // Predicated region
  $region18: #{estimate_rho_forward.1} parent=0 // pred_check
    _
  $region19: #{estimate_rho_forward.1} parent=0 // pred_check_branch
    %23 = sbr.rel (0) target = $region21
  $region20: #{estimate_rho_forward.1} parent=0 // pred_region
    _
  $region21: #{estimate_rho_forward.1} parent=0 // pred_fallthru
    _
  // Predicated region
  $region22: #{estimate_rho_forward.1} parent=0 // pred_check
    _
  $region23: #{estimate_rho_forward.1} parent=0 // pred_check_branch
    %25 = sbr.rel (0) target = $region25
  $region24: #{estimate_rho_forward.1} parent=0 // pred_region
    _
  $region25: #{estimate_rho_forward.1} parent=0 // pred_fallthru
    _
  // Predicated region
  $region26: #{estimate_rho_forward.1} parent=0 // pred_check
    _
  $region27: #{estimate_rho_forward.1} parent=0 // pred_check_branch
    %27 = sbr.rel (0) target = $region29
  $region28: #{estimate_rho_forward.1} parent=0 // pred_region
    _
  $region29: #{estimate_rho_forward.1} parent=0 // pred_fallthru
    _
  // Predicated region
  $region30: #{estimate_rho_forward.1} parent=0 // pred_check
    _
  $region31: #{estimate_rho_forward.1} parent=0 // pred_check_branch
    %29 = sbr.rel (0) target = $region33
  $region32: #{estimate_rho_forward.1} parent=0 // pred_region
    _
  $region33: #{estimate_rho_forward.1} parent=0 // pred_fallthru
    _
  // Predicated region
  $region34: #{estimate_rho_forward.1} parent=0 // pred_check
    _
  $region35: #{estimate_rho_forward.1} parent=0 // pred_check_branch
    %31 = sbr.rel (0) target = $region37
  $region36: #{estimate_rho_forward.1} parent=0 // pred_region
    _
  $region37: #{estimate_rho_forward.1} parent=0 // pred_fallthru
    _
  %v33 = vld [vmem:[%s0] sm:$0xf]
  %v34 = vld [vmem:[%s1] sm:$0xff]
  %v35 = vld [vmem:[%s1 + $0x8] sm:$0xff]
  %v36 = vld [vmem:[%s1 + $0x10] sm:$0xff]
  %v37 = vld [vmem:[%s1 + $0x18] sm:$0xff]
  %v38 = vld [vmem:[%s1 + $0x20] sm:$0xff]
  %v39 = vld [vmem:[%s1 + $0x28] sm:$0xff]
  %v40 = vld [vmem:[%s1 + $0x30] sm:$0xff]
  %v41 = vld [vmem:[%s1 + $0x38] sm:$0xff]
  %v42 = vld [vmem:[%s2] sm:$0xf]
  %v44 = vlaneseq
  %v45 = vshrl.u32 %v44, 7
  %v46 = vsub.s32 0, %v45
  %v47 = vrot.slane %v42, %v46
  %v48 = vlaneseq
  %v49 = vshrl.u32 %v48, 7
  %v50 = vsub.s32 1, %v49
  %v51 = vrot.slane %v42, %v50
  %v52 = vlaneseq
  %v53 = vshrl.u32 %v52, 7
  %v54 = vsub.s32 2, %v53
  %v55 = vrot.slane %v42, %v54
  %v56 = vlaneseq
  %v57 = vshrl.u32 %v56, 7
  %v58 = vsub.s32 3, %v57
  %v59 = vrot.slane %v42, %v58
  %v72 = vunpack.c.l.b16 %v34
  %v73 = vunpack.c.h.b16 %v34
  %v74 = vunpack.c.l.b16 %v35
  %v75 = vunpack.c.h.b16 %v35
  %v76 = vunpack.c.l.b16 %v36
  %v77 = vunpack.c.h.b16 %v36
  %v78 = vunpack.c.l.b16 %v37
  %v79 = vunpack.c.h.b16 %v37
  %v80 = vunpack.c.l.b16 %v38
  %v81 = vunpack.c.h.b16 %v38
  %v82 = vunpack.c.l.b16 %v39
  %v83 = vunpack.c.h.b16 %v39
  %v84 = vunpack.c.l.b16 %v40
  %v85 = vunpack.c.h.b16 %v40
  %v86 = vunpack.c.l.b16 %v41
  %v87 = vunpack.c.h.b16 %v41
  %v88 = vpack.c.b16 %v76, %v72
  %v89 = vpack.c.b16 %v77, %v73
  %v90 = vpack.c.b16 %v78, %v74
  %v91 = vpack.c.b16 %v79, %v75
  %v92 = vpack.c.b16 %v84, %v80
  %v93 = vpack.c.b16 %v85, %v81
  %v94 = vpack.c.b16 %v86, %v82
  %v95 = vpack.c.b16 %v87, %v83
  %vm104 = vcmask 261120
  %v106 = vsel %vm104, %v33, 0
  %108 = vmatprep.subr.bf16.mxu0 %v89
  %109 = vmatpush1.bf16.msra.mxu0 %v88
  %110 = vmatprep.subr.bf16.mxu0 %v93
  %111 = vmatpush1.bf16.msra.mxu0 %v92
  %112 = vmatprep.subr.bf16.mxu0 0
  %113 = vmatpush1.bf16.msra.mxu0 0
  %114 = vmatprep.subr.bf16.mxu0 0
  %115 = vmatpush1.bf16.msra.mxu0 0
  %116 = vmatprep.subr.bf16.mxu0 0
  %117 = vmatpush1.bf16.msra.mxu0 0
  %118 = vmatprep.subr.bf16.mxu0 0
  %119 = vmatpush1.bf16.msra.mxu0 0
  %120 = vmatprep.subr.bf16.mxu0 0
  %121 = vmatpush1.bf16.msra.mxu0 0
  %122 = vmatprep.subr.bf16.mxu0 0
  %123 = vmatpush1.bf16.msra.mxu0 0
  %124 = vmatprep.subr.bf16.mxu0 0
  %125 = vmatpush1.bf16.msra.mxu0 0
  %126 = vmatprep.subr.bf16.mxu0 0
  %127 = vmatpush1.bf16.msra.mxu0 0
  %128 = vmatprep.subr.bf16.mxu0 0
  %129 = vmatpush1.bf16.msra.mxu0 0
  %130 = vmatprep.subr.bf16.mxu0 0
  %131 = vmatpush1.bf16.msra.mxu0 0
  %132 = vmatprep.subr.bf16.mxu0 0
  %133 = vmatpush1.bf16.msra.mxu0 0
  %134 = vmatprep.subr.bf16.mxu0 0
  %135 = vmatpush1.bf16.msra.mxu0 0
  %136 = vmatprep.subr.bf16.mxu0 0
  %137 = vmatpush1.bf16.msra.mxu0 0
  %138 = vmatprep.subr.bf16.mxu0 0
  %139 = vmatpush1.bf16.msra.mxu0 0
  %140 = vmatprep.mubr.bf16.mxu0 0
  %141 = vmatmul.mubr.bf16.gmra.mrb[0].mxu0 %v106
  %v142 = vpop.f32.mrb[0].mxu0
  %v143 = vadd.f32 %v47, %v142
  %v144 = vpop.f32.mrb[0].mxu0
  %v145 = vadd.f32 %v51, %v144
  %v146 = vpop.f32.mrb[0].mxu0
  %v147 = vpop.f32.mrb[0].mxu0
  %148 = vdwg.mxu0
  %149 = vmatprep.subr.bf16.mxu0 %v91
  %150 = vmatpush1.bf16.msra.mxu0 %v90
  %151 = vmatprep.subr.bf16.mxu0 %v95
  %152 = vmatpush1.bf16.msra.mxu0 %v94
  %153 = vmatprep.subr.bf16.mxu0 0
  %154 = vmatpush1.bf16.msra.mxu0 0
  %155 = vmatprep.subr.bf16.mxu0 0
  %156 = vmatpush1.bf16.msra.mxu0 0
  %157 = vmatprep.subr.bf16.mxu0 0
  %158 = vmatpush1.bf16.msra.mxu0 0
  %159 = vmatprep.subr.bf16.mxu0 0
  %160 = vmatpush1.bf16.msra.mxu0 0
  %161 = vmatprep.subr.bf16.mxu0 0
  %162 = vmatpush1.bf16.msra.mxu0 0
  %163 = vmatprep.subr.bf16.mxu0 0
  %164 = vmatpush1.bf16.msra.mxu0 0
  %165 = vmatprep.subr.bf16.mxu0 0
  %166 = vmatpush1.bf16.msra.mxu0 0
  %167 = vmatprep.subr.bf16.mxu0 0
  %168 = vmatpush1.bf16.msra.mxu0 0
  %169 = vmatprep.subr.bf16.mxu0 0
  %170 = vmatpush1.bf16.msra.mxu0 0
  %171 = vmatprep.subr.bf16.mxu0 0
  %172 = vmatpush1.bf16.msra.mxu0 0
  %173 = vmatprep.subr.bf16.mxu0 0
  %174 = vmatpush1.bf16.msra.mxu0 0
  %175 = vmatprep.subr.bf16.mxu0 0
  %176 = vmatpush1.bf16.msra.mxu0 0
  %177 = vmatprep.subr.bf16.mxu0 0
  %178 = vmatpush1.bf16.msra.mxu0 0
  %179 = vmatprep.subr.bf16.mxu0 0
  %180 = vmatpush1.bf16.msra.mxu0 0
  %181 = vmatprep.mubr.bf16.mxu0 0
  %182 = vmatmul.mubr.bf16.gmra.mrb[0].mxu0 %v106
  %v183 = vpop.f32.mrb[0].mxu0
  %v184 = vadd.f32 %v55, %v183
  %v185 = vpop.f32.mrb[0].mxu0
  %v186 = vadd.f32 %v59, %v185
  %v187 = vpop.f32.mrb[0].mxu0
  %v188 = vpop.f32.mrb[0].mxu0
  %189 = vdwg.mxu0
  %v190 = vmax.f32 %v143, 0.0
  %v191 = vmax.f32 %v145, 0.0
  %v192 = vmax.f32 %v184, 0.0
  %v193 = vmax.f32 %v186, 0.0
  %v194 = vpack.c.bf16 %v190, %v190
  %v195 = vpack.c.bf16 %v191, %v191
  %v196 = vpack.c.bf16 %v192, %v192
  %v197 = vpack.c.bf16 %v193, %v193
  %v198 = vld [vmem:[%s3] sm:$0xf]
  %v199 = vld [vmem:[%s3 + $0x4] sm:$0xf]
  %v200 = vld [vmem:[%s3 + $0x8] sm:$0xf]
  %v201 = vld [vmem:[%s3 + $0xc] sm:$0xf]
  %v202 = vld [vmem:[%s3 + $0x10] sm:$0xf]
  %v203 = vld [vmem:[%s3 + $0x14] sm:$0xf]
  %v204 = vld [vmem:[%s3 + $0x18] sm:$0xf]
  %v205 = vld [vmem:[%s3 + $0x1c] sm:$0xf]
  %v206 = vld [vmem:[%s3 + $0x20] sm:$0xf]
  %v207 = vld [vmem:[%s3 + $0x24] sm:$0xf]
  %v208 = vld [vmem:[%s3 + $0x28] sm:$0xf]
  %v209 = vld [vmem:[%s3 + $0x2c] sm:$0xf]
  %v210 = vld [vmem:[%s3 + $0x30] sm:$0xf]
  %v211 = vld [vmem:[%s3 + $0x34] sm:$0xf]
  %v212 = vld [vmem:[%s3 + $0x38] sm:$0xf]
  %v213 = vld [vmem:[%s3 + $0x3c] sm:$0xf]
  %v214 = vld [vmem:[%s3 + $0x40] sm:$0xf]
  %v215 = vld [vmem:[%s3 + $0x44] sm:$0xf]
  %v216 = vld [vmem:[%s3 + $0x48] sm:$0xf]
  %v217 = vld [vmem:[%s3 + $0x4c] sm:$0xf]
  %v218 = vld [vmem:[%s3 + $0x50] sm:$0xf]
  %v219 = vld [vmem:[%s3 + $0x54] sm:$0xf]
  %v220 = vld [vmem:[%s3 + $0x58] sm:$0xf]
  %v221 = vld [vmem:[%s3 + $0x5c] sm:$0xf]
  %v222 = vld [vmem:[%s3 + $0x60] sm:$0xf]
  %v223 = vld [vmem:[%s3 + $0x64] sm:$0xf]
  %v224 = vld [vmem:[%s3 + $0x68] sm:$0xf]
  %v225 = vld [vmem:[%s3 + $0x6c] sm:$0xf]
  %v226 = vld [vmem:[%s3 + $0x70] sm:$0xf]
  %v227 = vld [vmem:[%s3 + $0x74] sm:$0xf]
  %v228 = vld [vmem:[%s3 + $0x78] sm:$0xf]
  %v229 = vld [vmem:[%s3 + $0x7c] sm:$0xf]
  %v230 = vld [vmem:[%s3 + $0x80] sm:$0xf]
  %v231 = vld [vmem:[%s3 + $0x84] sm:$0xf]
  %v232 = vld [vmem:[%s3 + $0x88] sm:$0xf]
  %v233 = vld [vmem:[%s3 + $0x8c] sm:$0xf]
  %v234 = vld [vmem:[%s3 + $0x90] sm:$0xf]
  %v235 = vld [vmem:[%s3 + $0x94] sm:$0xf]
  %v236 = vld [vmem:[%s3 + $0x98] sm:$0xf]
  %v237 = vld [vmem:[%s3 + $0x9c] sm:$0xf]
  %v238 = vld [vmem:[%s3 + $0xa0] sm:$0xf]
  %v239 = vld [vmem:[%s3 + $0xa4] sm:$0xf]
  %v240 = vld [vmem:[%s3 + $0xa8] sm:$0xf]
  %v241 = vld [vmem:[%s3 + $0xac] sm:$0xf]
  %v242 = vld [vmem:[%s3 + $0xb0] sm:$0xf]
  %v243 = vld [vmem:[%s3 + $0xb4] sm:$0xf]
  %v244 = vld [vmem:[%s3 + $0xb8] sm:$0xf]
  %v245 = vld [vmem:[%s3 + $0xbc] sm:$0xf]
  %v246 = vld [vmem:[%s3 + $0xc0] sm:$0xf]
  %v247 = vld [vmem:[%s3 + $0xc4] sm:$0xf]
  %v248 = vld [vmem:[%s3 + $0xc8] sm:$0xf]
  %v249 = vld [vmem:[%s3 + $0xcc] sm:$0xf]
  %v250 = vld [vmem:[%s3 + $0xd0] sm:$0xf]
  %v251 = vld [vmem:[%s3 + $0xd4] sm:$0xf]
  %v252 = vld [vmem:[%s3 + $0xd8] sm:$0xf]
  %v253 = vld [vmem:[%s3 + $0xdc] sm:$0xf]
  %v254 = vld [vmem:[%s3 + $0xe0] sm:$0xf]
  %v255 = vld [vmem:[%s3 + $0xe4] sm:$0xf]
  %v256 = vld [vmem:[%s3 + $0xe8] sm:$0xf]
  %v257 = vld [vmem:[%s3 + $0xec] sm:$0xf]
  %v258 = vld [vmem:[%s3 + $0xf0] sm:$0xf]
  %v259 = vld [vmem:[%s3 + $0xf4] sm:$0xf]
  %v260 = vld [vmem:[%s3 + $0xf8] sm:$0xf]
  %v261 = vld [vmem:[%s3 + $0xfc] sm:$0xf]
  %v262 = vld [vmem:[%s4] sm:$0x1]
  %v264 = vlaneseq
  %v265 = vshrl.u32 %v264, 7
  %v266 = vsub.s32 0, %v265
  %v267 = vrot.slane %v262, %v266
  %v333 = vunpack.c.l.b16 %v198
  %v334 = vunpack.c.l.b16 %v199
  %v335 = vunpack.c.l.b16 %v200
  %v336 = vunpack.c.l.b16 %v201
  %v337 = vunpack.c.l.b16 %v202
  %v338 = vunpack.c.l.b16 %v203
  %v339 = vunpack.c.l.b16 %v204
  %v340 = vunpack.c.l.b16 %v205
  %v341 = vunpack.c.l.b16 %v206
  %v342 = vunpack.c.l.b16 %v207
  %v343 = vunpack.c.l.b16 %v208
  %v344 = vunpack.c.l.b16 %v209
  %v345 = vunpack.c.l.b16 %v210
  %v346 = vunpack.c.l.b16 %v211
  %v347 = vunpack.c.l.b16 %v212
  %v348 = vunpack.c.l.b16 %v213
  %v349 = vunpack.c.l.b16 %v214
  %v350 = vunpack.c.l.b16 %v215
  %v351 = vunpack.c.l.b16 %v216
  %v352 = vunpack.c.l.b16 %v217
  %v353 = vunpack.c.l.b16 %v218
  %v354 = vunpack.c.l.b16 %v219
  %v355 = vunpack.c.l.b16 %v220
  %v356 = vunpack.c.l.b16 %v221
  %v357 = vunpack.c.l.b16 %v222
  %v358 = vunpack.c.l.b16 %v223
  %v359 = vunpack.c.l.b16 %v224
  %v360 = vunpack.c.l.b16 %v225
  %v361 = vunpack.c.l.b16 %v226
  %v362 = vunpack.c.l.b16 %v227
  %v363 = vunpack.c.l.b16 %v228
  %v364 = vunpack.c.l.b16 %v229
  %v365 = vunpack.c.l.b16 %v230
  %v366 = vunpack.c.l.b16 %v231
  %v367 = vunpack.c.l.b16 %v232
  %v368 = vunpack.c.l.b16 %v233
  %v369 = vunpack.c.l.b16 %v234
  %v370 = vunpack.c.l.b16 %v235
  %v371 = vunpack.c.l.b16 %v236
  %v372 = vunpack.c.l.b16 %v237
  %v373 = vunpack.c.l.b16 %v238
  %v374 = vunpack.c.l.b16 %v239
  %v375 = vunpack.c.l.b16 %v240
  %v376 = vunpack.c.l.b16 %v241
  %v377 = vunpack.c.l.b16 %v242
  %v378 = vunpack.c.l.b16 %v243
  %v379 = vunpack.c.l.b16 %v244
  %v380 = vunpack.c.l.b16 %v245
  %v381 = vunpack.c.l.b16 %v246
  %v382 = vunpack.c.l.b16 %v247
  %v383 = vunpack.c.l.b16 %v248
  %v384 = vunpack.c.l.b16 %v249
  %v385 = vunpack.c.l.b16 %v250
  %v386 = vunpack.c.l.b16 %v251
  %v387 = vunpack.c.l.b16 %v252
  %v388 = vunpack.c.l.b16 %v253
  %v389 = vunpack.c.l.b16 %v254
  %v390 = vunpack.c.l.b16 %v255
  %v391 = vunpack.c.l.b16 %v256
  %v392 = vunpack.c.l.b16 %v257
  %v393 = vunpack.c.l.b16 %v258
  %v394 = vunpack.c.l.b16 %v259
  %v395 = vunpack.c.l.b16 %v260
  %v396 = vunpack.c.l.b16 %v261
  %v397 = vpack.c.b16 %v334, %v333
  %v398 = vpack.c.b16 %v336, %v335
  %v399 = vpack.c.b16 %v338, %v337
  %v400 = vpack.c.b16 %v340, %v339
  %v401 = vpack.c.b16 %v342, %v341
  %v402 = vpack.c.b16 %v344, %v343
  %v403 = vpack.c.b16 %v346, %v345
  %v404 = vpack.c.b16 %v348, %v347
  %v405 = vpack.c.b16 %v350, %v349
  %v406 = vpack.c.b16 %v352, %v351
  %v407 = vpack.c.b16 %v354, %v353
  %v408 = vpack.c.b16 %v356, %v355
  %v409 = vpack.c.b16 %v358, %v357
  %v410 = vpack.c.b16 %v360, %v359
  %v411 = vpack.c.b16 %v362, %v361
  %v412 = vpack.c.b16 %v364, %v363
  %v413 = vpack.c.b16 %v366, %v365
  %v414 = vpack.c.b16 %v368, %v367
  %v415 = vpack.c.b16 %v370, %v369
  %v416 = vpack.c.b16 %v372, %v371
  %v417 = vpack.c.b16 %v374, %v373
  %v418 = vpack.c.b16 %v376, %v375
  %v419 = vpack.c.b16 %v378, %v377
  %v420 = vpack.c.b16 %v380, %v379
  %v421 = vpack.c.b16 %v382, %v381
  %v422 = vpack.c.b16 %v384, %v383
  %v423 = vpack.c.b16 %v386, %v385
  %v424 = vpack.c.b16 %v388, %v387
  %v425 = vpack.c.b16 %v390, %v389
  %v426 = vpack.c.b16 %v392, %v391
  %v427 = vpack.c.b16 %v394, %v393
  %v428 = vpack.c.b16 %v396, %v395
  %461 = vmatprep.subr.bf16.mxu0 0
  %462 = vmatpush1.bf16.msra.mxu0 %v397
  %463 = vmatprep.subr.bf16.mxu0 0
  %464 = vmatpush1.bf16.msra.mxu0 %v398
  %465 = vmatprep.subr.bf16.mxu0 0
  %466 = vmatpush1.bf16.msra.mxu0 %v399
  %467 = vmatprep.subr.bf16.mxu0 0
  %468 = vmatpush1.bf16.msra.mxu0 %v400
  %469 = vmatprep.subr.bf16.mxu0 0
  %470 = vmatpush1.bf16.msra.mxu0 %v401
  %471 = vmatprep.subr.bf16.mxu0 0
  %472 = vmatpush1.bf16.msra.mxu0 %v402
  %473 = vmatprep.subr.bf16.mxu0 0
  %474 = vmatpush1.bf16.msra.mxu0 %v403
  %475 = vmatprep.subr.bf16.mxu0 0
  %476 = vmatpush1.bf16.msra.mxu0 %v404
  %477 = vmatprep.subr.bf16.mxu0 0
  %478 = vmatpush1.bf16.msra.mxu0 %v405
  %479 = vmatprep.subr.bf16.mxu0 0
  %480 = vmatpush1.bf16.msra.mxu0 %v406
  %481 = vmatprep.subr.bf16.mxu0 0
  %482 = vmatpush1.bf16.msra.mxu0 %v407
  %483 = vmatprep.subr.bf16.mxu0 0
  %484 = vmatpush1.bf16.msra.mxu0 %v408
  %485 = vmatprep.subr.bf16.mxu0 0
  %486 = vmatpush1.bf16.msra.mxu0 %v409
  %487 = vmatprep.subr.bf16.mxu0 0
  %488 = vmatpush1.bf16.msra.mxu0 %v410
  %489 = vmatprep.subr.bf16.mxu0 0
  %490 = vmatpush1.bf16.msra.mxu0 %v411
  %491 = vmatprep.subr.bf16.mxu0 0
  %492 = vmatpush1.bf16.msra.mxu0 %v412
  %493 = vmatprep.mubr.bf16.mxu0 %v195
  %494 = vmatmul.mubr.bf16.gmra.mrb[0].mxu0 %v194
  %v495 = vpop.f32.mrb[0].mxu0
  %v496 = vadd.f32 %v267, %v495
  %v497 = vpop.f32.mrb[0].mxu0
  %v498 = vpop.f32.mrb[0].mxu0
  %v499 = vpop.f32.mrb[0].mxu0
  %500 = vdwg.mxu0
  %501 = vmatprep.subr.bf16.mxu0 0
  %502 = vmatpush1.bf16.msra.mxu0 %v413
  %503 = vmatprep.subr.bf16.mxu0 0
  %504 = vmatpush1.bf16.msra.mxu0 %v414
  %505 = vmatprep.subr.bf16.mxu0 0
  %506 = vmatpush1.bf16.msra.mxu0 %v415
  %507 = vmatprep.subr.bf16.mxu0 0
  %508 = vmatpush1.bf16.msra.mxu0 %v416
  %509 = vmatprep.subr.bf16.mxu0 0
  %510 = vmatpush1.bf16.msra.mxu0 %v417
  %511 = vmatprep.subr.bf16.mxu0 0
  %512 = vmatpush1.bf16.msra.mxu0 %v418
  %513 = vmatprep.subr.bf16.mxu0 0
  %514 = vmatpush1.bf16.msra.mxu0 %v419
  %515 = vmatprep.subr.bf16.mxu0 0
  %516 = vmatpush1.bf16.msra.mxu0 %v420
  %517 = vmatprep.subr.bf16.mxu0 0
  %518 = vmatpush1.bf16.msra.mxu0 %v421
  %519 = vmatprep.subr.bf16.mxu0 0
  %520 = vmatpush1.bf16.msra.mxu0 %v422
  %521 = vmatprep.subr.bf16.mxu0 0
  %522 = vmatpush1.bf16.msra.mxu0 %v423
  %523 = vmatprep.subr.bf16.mxu0 0
  %524 = vmatpush1.bf16.msra.mxu0 %v424
  %525 = vmatprep.subr.bf16.mxu0 0
  %526 = vmatpush1.bf16.msra.mxu0 %v425
  %527 = vmatprep.subr.bf16.mxu0 0
  %528 = vmatpush1.bf16.msra.mxu0 %v426
  %529 = vmatprep.subr.bf16.mxu0 0
  %530 = vmatpush1.bf16.msra.mxu0 %v427
  %531 = vmatprep.subr.bf16.mxu0 0
  %532 = vmatpush1.bf16.msra.mxu0 %v428
  %533 = vmatprep.mubr.bf16.mxu0 %v197
  %534 = vmatmul.mubr.bf16.gmra.mrb[0].mxu0 %v196
  %v535 = vpop.f32.mrb[0].mxu0
  %v536 = vadd.f32 %v496, %v535
  %v537 = vpop.f32.mrb[0].mxu0
  %v538 = vpop.f32.mrb[0].mxu0
  %v539 = vpop.f32.mrb[0].mxu0
  %540 = vdwg.mxu0
  %v541 = vmax.f32 %v536, 0.0
  %v542 = vpack.c.bf16 %v541, %v541
  %v543 = vld [vmem:[%s5] sm:$0xf]
  %v544 = vld [vmem:[%s5 + $0x4] sm:$0xf]
  %v545 = vld [vmem:[%s5 + $0x8] sm:$0xf]
  %v546 = vld [vmem:[%s5 + $0xc] sm:$0xf]
  %v547 = vld [vmem:[%s5 + $0x10] sm:$0xf]
  %v548 = vld [vmem:[%s5 + $0x14] sm:$0xf]
  %v549 = vld [vmem:[%s5 + $0x18] sm:$0xf]
  %v550 = vld [vmem:[%s5 + $0x1c] sm:$0xf]
  %v551 = vld [vmem:[%s5 + $0x20] sm:$0xf]
  %v552 = vld [vmem:[%s5 + $0x24] sm:$0xf]
  %v553 = vld [vmem:[%s5 + $0x28] sm:$0xf]
  %v554 = vld [vmem:[%s5 + $0x2c] sm:$0xf]
  %v555 = vld [vmem:[%s5 + $0x30] sm:$0xf]
  %v556 = vld [vmem:[%s5 + $0x34] sm:$0xf]
  %v557 = vld [vmem:[%s5 + $0x38] sm:$0xf]
  %v558 = vld [vmem:[%s5 + $0x3c] sm:$0xf]
  %v559 = vld [vmem:[%s6] sm:$0x1]
  %v561 = vlaneseq
  %v562 = vshrl.u32 %v561, 7
  %v563 = vsub.s32 0, %v562
  %v564 = vrot.slane %v559, %v563
  %v582 = vunpack.c.l.b16 %v543
  %v583 = vunpack.c.l.b16 %v544
  %v584 = vunpack.c.l.b16 %v545
  %v585 = vunpack.c.l.b16 %v546
  %v586 = vunpack.c.l.b16 %v547
  %v587 = vunpack.c.l.b16 %v548
  %v588 = vunpack.c.l.b16 %v549
  %v589 = vunpack.c.l.b16 %v550
  %v590 = vunpack.c.l.b16 %v551
  %v591 = vunpack.c.l.b16 %v552
  %v592 = vunpack.c.l.b16 %v553
  %v593 = vunpack.c.l.b16 %v554
  %v594 = vunpack.c.l.b16 %v555
  %v595 = vunpack.c.l.b16 %v556
  %v596 = vunpack.c.l.b16 %v557
  %v597 = vunpack.c.l.b16 %v558
  %v598 = vpack.c.b16 %v583, %v582
  %v599 = vpack.c.b16 %v585, %v584
  %v600 = vpack.c.b16 %v587, %v586
  %v601 = vpack.c.b16 %v589, %v588
  %v602 = vpack.c.b16 %v591, %v590
  %v603 = vpack.c.b16 %v593, %v592
  %v604 = vpack.c.b16 %v595, %v594
  %v605 = vpack.c.b16 %v597, %v596
  %614 = vmatprep.subr.bf16.mxu0 0
  %615 = vmatpush1.bf16.msra.mxu0 %v598
  %616 = vmatprep.subr.bf16.mxu0 0
  %617 = vmatpush1.bf16.msra.mxu0 %v599
  %618 = vmatprep.subr.bf16.mxu0 0
  %619 = vmatpush1.bf16.msra.mxu0 %v600
  %620 = vmatprep.subr.bf16.mxu0 0
  %621 = vmatpush1.bf16.msra.mxu0 %v601
  %622 = vmatprep.subr.bf16.mxu0 0
  %623 = vmatpush1.bf16.msra.mxu0 %v602
  %624 = vmatprep.subr.bf16.mxu0 0
  %625 = vmatpush1.bf16.msra.mxu0 %v603
  %626 = vmatprep.subr.bf16.mxu0 0
  %627 = vmatpush1.bf16.msra.mxu0 %v604
  %628 = vmatprep.subr.bf16.mxu0 0
  %629 = vmatpush1.bf16.msra.mxu0 %v605
  %630 = vmatprep.subr.bf16.mxu0 0
  %631 = vmatpush1.bf16.msra.mxu0 0
  %632 = vmatprep.subr.bf16.mxu0 0
  %633 = vmatpush1.bf16.msra.mxu0 0
  %634 = vmatprep.subr.bf16.mxu0 0
  %635 = vmatpush1.bf16.msra.mxu0 0
  %636 = vmatprep.subr.bf16.mxu0 0
  %637 = vmatpush1.bf16.msra.mxu0 0
  %638 = vmatprep.subr.bf16.mxu0 0
  %639 = vmatpush1.bf16.msra.mxu0 0
  %640 = vmatprep.subr.bf16.mxu0 0
  %641 = vmatpush1.bf16.msra.mxu0 0
  %642 = vmatprep.subr.bf16.mxu0 0
  %643 = vmatpush1.bf16.msra.mxu0 0
  %644 = vmatprep.subr.bf16.mxu0 0
  %645 = vmatpush1.bf16.msra.mxu0 0
  %646 = vmatprep.mubr.bf16.mxu0 0
  %647 = vmatmul.mubr.bf16.gmra.mrb[0].mxu0 %v542
  %v648 = vpop.f32.mrb[0].mxu0
  %v649 = vadd.f32 %v564, %v648
  %v650 = vpop.f32.mrb[0].mxu0
  %v651 = vpop.f32.mrb[0].mxu0
  %v652 = vpop.f32.mrb[0].mxu0
  %653 = vdwg.mxu0
  %v654 = vmax.f32 %v649, 0.0
  %v655 = vpack.c.bf16 %v654, %v654
  %v656 = vld [vmem:[%s7] sm:$0xf]
  %v657 = vld [vmem:[%s7 + $0x4] sm:$0xf]
  %v658 = vld [vmem:[%s7 + $0x8] sm:$0xf]
  %v659 = vld [vmem:[%s7 + $0xc] sm:$0xf]
  %v660 = vld [vmem:[%s7 + $0x10] sm:$0xf]
  %v661 = vld [vmem:[%s7 + $0x14] sm:$0xf]
  %v662 = vld [vmem:[%s7 + $0x18] sm:$0xf]
  %v663 = vld [vmem:[%s7 + $0x1c] sm:$0xf]
  %v664 = vld [vmem:[%s7 + $0x20] sm:$0xf]
  %v665 = vld [vmem:[%s7 + $0x24] sm:$0xf]
  %v666 = vld [vmem:[%s7 + $0x28] sm:$0xf]
  %v667 = vld [vmem:[%s7 + $0x2c] sm:$0xf]
  %v668 = vld [vmem:[%s7 + $0x30] sm:$0xf]
  %v669 = vld [vmem:[%s7 + $0x34] sm:$0xf]
  %v670 = vld [vmem:[%s7 + $0x38] sm:$0xf]
  %v671 = vld [vmem:[%s7 + $0x3c] sm:$0xf]
  %v672 = vld [vmem:[%s8] sm:$0x1]
  %v674 = vlaneseq
  %v675 = vshrl.u32 %v674, 7
  %v676 = vsub.s32 0, %v675
  %v677 = vrot.slane %v672, %v676
  %v695 = vunpack.c.l.b16 %v656
  %v696 = vunpack.c.l.b16 %v657
  %v697 = vunpack.c.l.b16 %v658
  %v698 = vunpack.c.l.b16 %v659
  %v699 = vunpack.c.l.b16 %v660
  %v700 = vunpack.c.l.b16 %v661
  %v701 = vunpack.c.l.b16 %v662
  %v702 = vunpack.c.l.b16 %v663
  %v703 = vunpack.c.l.b16 %v664
  %v704 = vunpack.c.l.b16 %v665
  %v705 = vunpack.c.l.b16 %v666
  %v706 = vunpack.c.l.b16 %v667
  %v707 = vunpack.c.l.b16 %v668
  %v708 = vunpack.c.l.b16 %v669
  %v709 = vunpack.c.l.b16 %v670
  %v710 = vunpack.c.l.b16 %v671
  %v711 = vpack.c.b16 %v696, %v695
  %v712 = vpack.c.b16 %v698, %v697
  %v713 = vpack.c.b16 %v700, %v699
  %v714 = vpack.c.b16 %v702, %v701
  %v715 = vpack.c.b16 %v704, %v703
  %v716 = vpack.c.b16 %v706, %v705
  %v717 = vpack.c.b16 %v708, %v707
  %v718 = vpack.c.b16 %v710, %v709
  %727 = vmatprep.subr.bf16.mxu0 0
  %728 = vmatpush1.bf16.msra.mxu0 %v711
  %729 = vmatprep.subr.bf16.mxu0 0
  %730 = vmatpush1.bf16.msra.mxu0 %v712
  %731 = vmatprep.subr.bf16.mxu0 0
  %732 = vmatpush1.bf16.msra.mxu0 %v713
  %733 = vmatprep.subr.bf16.mxu0 0
  %734 = vmatpush1.bf16.msra.mxu0 %v714
  %735 = vmatprep.subr.bf16.mxu0 0
  %736 = vmatpush1.bf16.msra.mxu0 %v715
  %737 = vmatprep.subr.bf16.mxu0 0
  %738 = vmatpush1.bf16.msra.mxu0 %v716
  %739 = vmatprep.subr.bf16.mxu0 0
  %740 = vmatpush1.bf16.msra.mxu0 %v717
  %741 = vmatprep.subr.bf16.mxu0 0
  %742 = vmatpush1.bf16.msra.mxu0 %v718
  %743 = vmatprep.subr.bf16.mxu0 0
  %744 = vmatpush1.bf16.msra.mxu0 0
  %745 = vmatprep.subr.bf16.mxu0 0
  %746 = vmatpush1.bf16.msra.mxu0 0
  %747 = vmatprep.subr.bf16.mxu0 0
  %748 = vmatpush1.bf16.msra.mxu0 0
  %749 = vmatprep.subr.bf16.mxu0 0
  %750 = vmatpush1.bf16.msra.mxu0 0
  %751 = vmatprep.subr.bf16.mxu0 0
  %752 = vmatpush1.bf16.msra.mxu0 0
  %753 = vmatprep.subr.bf16.mxu0 0
  %754 = vmatpush1.bf16.msra.mxu0 0
  %755 = vmatprep.subr.bf16.mxu0 0
  %756 = vmatpush1.bf16.msra.mxu0 0
  %757 = vmatprep.subr.bf16.mxu0 0
  %758 = vmatpush1.bf16.msra.mxu0 0
  %759 = vmatprep.mubr.bf16.mxu0 0
  %760 = vmatmul.mubr.bf16.gmra.mrb[0].mxu0 %v655
  %v761 = vpop.f32.mrb[0].mxu0
  %v762 = vadd.f32 %v677, %v761
  %v763 = vpop.f32.mrb[0].mxu0
  %v764 = vpop.f32.mrb[0].mxu0
  %v765 = vpop.f32.mrb[0].mxu0
  %766 = vdwg.mxu0
  %v767 = vmax.f32 %v762, 0.0
  %v768 = vand.u32 2147483647, %v762
  %v769 = vsub.f32 0.0, %v768
  %v770 = vmul.f32 %v769, 1.442695
  %v771 = vpow.pop %v770
  %v772 = vadd.f32 %v771, 1.0
  %v773 = vlog2.pop %v772
  %v774 = vmul.f32 %v773, 0.6931472
  %v775 = vmul.f32 -0.5, %v771
  %v776 = vadd.f32 %v775, 1.0
  %v777 = vmul.f32 %v776, %v771
  %v778 = vand.u32 2147483647, %v771
  %vm779 = vcmp.lt.f32.partialorder %v778, 0.0004427343
  %v780 = vsel %vm779, %v777, %v774
  %v781 = vadd.f32 %v767, %v780
  %782 = vst [vmem:[%s9] sm:$0xff] %v781
  // Predicated region
  $region38: #{estimate_rho_forward.1} parent=0 // pred_check
    _
  $region39: #{estimate_rho_forward.1} parent=0 // pred_check_branch
    %784 = sbr.rel (0) target = $region41
  $region40: #{estimate_rho_forward.1} parent=0 // pred_region
    _
  $region41: #{estimate_rho_forward.1} parent=0 // pred_fallthru
    _
  // Predicated region
  $region42: #{estimate_rho_forward.1} parent=0 // pred_check
    _
  $region43: #{estimate_rho_forward.1} parent=0 // pred_check_branch
    %786 = sbr.rel (0) target = $region45
  $region44: #{estimate_rho_forward.1} parent=0 // pred_region
    _
  $region45: #{estimate_rho_forward.1} parent=0 // pred_fallthru
    _

</llo_original>
